<compile_context>
chip_gen: v5e
topology: v5e:2x2
jax: 0.10.0
libtpu: 0.0.40
codegen_flags: <defaults>
</compile_context>

<pallas_src>
import numpy as np
import jax
import jax.numpy as jnp
from jax.experimental import pallas as pl
from jax.experimental.pallas import tpu as pltpu


def video_reencode(frames, *, in_fps, out_fps, start_second=0.0,
                   truncate_second=None, ring=8):
    """Temporal re-sampling of decoded video frames (ffmpeg `fps=` filter analogue).

    frames: [T_in, B, C, H, W] time-major decoded frame buffer (any dtype).
    Returns ([T_out, B, C, H, W], src_idx) with T_out = round(truncate_second * out_fps).
    """
    T_in, B = frames.shape[0], frames.shape[1]
    F = int(np.prod(frames.shape[2:]))          # flattened frame, lane-dense last dim
    x = frames.reshape(T_in, B, F)              # contiguous B*F slab per time index

    if truncate_second is None:
        truncate_second = T_in / float(in_fps)
    T_out = int(round(truncate_second * out_fps))
    assert T_out >= 1

    # Static source-frame indices: nearest decoded frame to each output
    # timestamp, offset by the -ss seek position (ffmpeg fps-filter analogue).
    t_out = np.arange(T_out, dtype=np.float64)
    src_times = start_second + t_out / float(out_fps)
    src_idx_np = np.clip(np.floor(src_times * in_fps + 0.5),
                         0, T_in - 1).astype(np.int32)
    src_idx = jnp.asarray(src_idx_np)

    assert ring >= 1 and (ring & (ring - 1)) == 0, "ring must be a power of two"

    def kernel(idx_ref, x_hbm, o_hbm, copy_sems):
        # idx_ref:   SMEM int32[T_out]  (scalar prefetch)
        # x_hbm:     HBM  [T_in, B, F]  (memory_space=pl.ANY)
        # o_hbm:     HBM  [T_out, B, F] (memory_space=pl.ANY)
        # copy_sems: DMA semaphores, shape (ring,)
        def issue(t, slot):
            # Direct HBM->HBM copy of one contiguous (B, F) frame slab.
            pltpu.make_async_copy(x_hbm.at[idx_ref[t]], o_hbm.at[t],
                                  copy_sems.at[slot]).start()

        def retire(slot):
            # Wait descriptor only needs matching transfer shape.
            pltpu.make_async_copy(x_hbm.at[0], o_hbm.at[0],
                                  copy_sems.at[slot]).wait()

        # Prime up to `ring` outstanding DMAs.
        for t in range(min(ring, T_out)):
            issue(t, t)

        # Steady state: retire slot t % ring, immediately refill it with frame
        # t + ring, so `ring` copies stay in flight until the tail drains.
        @pl.loop(0, T_out)
        def _(t):
            slot = t & (ring - 1)
            retire(slot)
            nxt = t + ring

            @pl.when(nxt < T_out)
            def _():
                issue(nxt, slot)

    grid_spec = pltpu.PrefetchScalarGridSpec(
        num_scalar_prefetch=1,                  # src_idx lands in SMEM
        grid=(1,),
        in_specs=[pl.BlockSpec(memory_space=pl.ANY)],   # raw HBM ref, no auto-DMA
        out_specs=pl.BlockSpec(memory_space=pl.ANY),
        scratch_shapes=[pltpu.SemaphoreType.DMA((ring,))],
    )

    bytes_accessed = 2 * T_out * B * F * x.dtype.itemsize
    out = pl.pallas_call(
        kernel,
        out_shape=jax.ShapeDtypeStruct((T_out, B, F), x.dtype),
        grid_spec=grid_spec,
        compiler_params=pltpu.CompilerParams(
            dimension_semantics=("arbitrary",)),
        cost_estimate=pl.CostEstimate(flops=0, transcendentals=0,
                                      bytes_accessed=bytes_accessed),
    )(src_idx, x)

    return out.reshape((T_out,) + frames.shape[1:]), src_idx_np


if __name__ == "__main__":
    # Deterministic synthetic "decoded video": batch_size=2 (module default),
    # 16 frames at 8 fps, each frame C=4, H=16, W=16 (C*H*W = 1024, lane-dense).
    key = jax.random.PRNGKey(0)
    B, T_in, C, H, W = 2, 16, 4, 16, 16

    in_fps = 8
    out_fps = 4            # VideoReencoder(fps=4)
    start_second = 0.0
    truncate_second = 2.0  # -> T_out = 8 output frames

    # Time-major decoded frame buffer [T, B, C, H, W].
    frames = jax.random.normal(key, (T_in, B, C, H, W), dtype=jnp.float32)

    out, src_idx = video_reencode(
        frames, in_fps=in_fps, out_fps=out_fps,
        start_second=start_second, truncate_second=truncate_second)
    out = jax.block_until_ready(out)

    T_out = int(round(truncate_second * out_fps))
    assert out.shape == (T_out, B, C, H, W)

    # Pure-JAX reference: gather the same source frames (bit-exact copy).
    ref = jnp.take(frames, jnp.asarray(src_idx), axis=0)
    np.testing.assert_array_equal(np.asarray(out), np.asarray(ref))

    print("KERNEL_OK")
</pallas_src>

<mosaic_0001>
module attributes {stable_mosaic.version = 11 : i64} {
  func.func @kernel(%arg0: i32, %arg1: memref<8xi32, #tpu.memory_space<smem>>, %arg2: memref<16x2x1024xf32, #tpu.memory_space<any>>, %arg3: memref<8x2x1024xf32, #tpu.memory_space<any>>, %arg4: memref<8x!tpu.dma_semaphore, #tpu.memory_space<semaphore_mem>>) attributes {dimension_semantics = [#tpu.dimension_semantics<arbitrary>], iteration_bounds = array<i64: 1>, scalar_prefetch = 1 : i64, scratch_operands = 1 : i64, tpu.core_type = #tpu.core_type<tc>, window_params = [{}, {}]} {
    %c0 = arith.constant 0 : index
    %0 = memref.load %arg1[%c0] : memref<8xi32, #tpu.memory_space<smem>>
    %c0_i32 = arith.constant 0 : i32
    %c0_i32_0 = arith.constant 0 : i32
    %c0_i32_1 = arith.constant 0 : i32
    %c0_i32_2 = arith.constant 0 : i32
    %1 = tpu.memref_slice %arg2[%0, %c0_i32_1, %c0_i32_2] : memref<16x2x1024xf32, #tpu.memory_space<any>> -> memref<1x2x1024xf32, #tpu.memory_space<any>>
    %2 = tpu.memref_squeeze %1 : memref<1x2x1024xf32, #tpu.memory_space<any>> -> memref<2x1024xf32, #tpu.memory_space<any>>
    %c0_i32_3 = arith.constant 0 : i32
    %c0_i32_4 = arith.constant 0 : i32
    %3 = tpu.memref_slice %arg3[%c0_i32, %c0_i32_3, %c0_i32_4] : memref<8x2x1024xf32, #tpu.memory_space<any>> -> memref<1x2x1024xf32, #tpu.memory_space<any>>
    %4 = tpu.memref_squeeze %3 : memref<1x2x1024xf32, #tpu.memory_space<any>> -> memref<2x1024xf32, #tpu.memory_space<any>>
    %5 = tpu.memref_slice %arg4[%c0_i32_0] : memref<8x!tpu.dma_semaphore, #tpu.memory_space<semaphore_mem>> -> memref<1x!tpu.dma_semaphore, #tpu.memory_space<semaphore_mem>>
    %6 = tpu.memref_squeeze %5 : memref<1x!tpu.dma_semaphore, #tpu.memory_space<semaphore_mem>> -> memref<!tpu.dma_semaphore, #tpu.memory_space<semaphore_mem>>
    tpu.enqueue_dma source(%2 : memref<2x1024xf32, #tpu.memory_space<any>>) target(%4 : memref<2x1024xf32, #tpu.memory_space<any>>) target_semaphore(%6 : memref<!tpu.dma_semaphore, #tpu.memory_space<semaphore_mem>>)
    %c1 = arith.constant 1 : index
    %7 = memref.load %arg1[%c1] : memref<8xi32, #tpu.memory_space<smem>>
    %c1_i32 = arith.constant 1 : i32
    %c1_i32_5 = arith.constant 1 : i32
    %c0_i32_6 = arith.constant 0 : i32
    %c0_i32_7 = arith.constant 0 : i32
    %8 = tpu.memref_slice %arg2[%7, %c0_i32_6, %c0_i32_7] : memref<16x2x1024xf32, #tpu.memory_space<any>> -> memref<1x2x1024xf32, #tpu.memory_space<any>>
    %9 = tpu.memref_squeeze %8 : memref<1x2x1024xf32, #tpu.memory_space<any>> -> memref<2x1024xf32, #tpu.memory_space<any>>
    %c0_i32_8 = arith.constant 0 : i32
    %c0_i32_9 = arith.constant 0 : i32
    %10 = tpu.memref_slice %arg3[%c1_i32, %c0_i32_8, %c0_i32_9] : memref<8x2x1024xf32, #tpu.memory_space<any>> -> memref<1x2x1024xf32, #tpu.memory_space<any>>
    %11 = tpu.memref_squeeze %10 : memref<1x2x1024xf32, #tpu.memory_space<any>> -> memref<2x1024xf32, #tpu.memory_space<any>>
    %12 = tpu.memref_slice %arg4[%c1_i32_5] : memref<8x!tpu.dma_semaphore, #tpu.memory_space<semaphore_mem>> -> memref<1x!tpu.dma_semaphore, #tpu.memory_space<semaphore_mem>>
    %13 = tpu.memref_squeeze %12 : memref<1x!tpu.dma_semaphore, #tpu.memory_space<semaphore_mem>> -> memref<!tpu.dma_semaphore, #tpu.memory_space<semaphore_mem>>
    tpu.enqueue_dma source(%9 : memref<2x1024xf32, #tpu.memory_space<any>>) target(%11 : memref<2x1024xf32, #tpu.memory_space<any>>) target_semaphore(%13 : memref<!tpu.dma_semaphore, #tpu.memory_space<semaphore_mem>>)
    %c2 = arith.constant 2 : index
    %14 = memref.load %arg1[%c2] : memref<8xi32, #tpu.memory_space<smem>>
    %c2_i32 = arith.constant 2 : i32
    %c2_i32_10 = arith.constant 2 : i32
    %c0_i32_11 = arith.constant 0 : i32
    %c0_i32_12 = arith.constant 0 : i32
    %15 = tpu.memref_slice %arg2[%14, %c0_i32_11, %c0_i32_12] : memref<16x2x1024xf32, #tpu.memory_space<any>> -> memref<1x2x1024xf32, #tpu.memory_space<any>>
    %16 = tpu.memref_squeeze %15 : memref<1x2x1024xf32, #tpu.memory_space<any>> -> memref<2x1024xf32, #tpu.memory_space<any>>
    %c0_i32_13 = arith.constant 0 : i32
    %c0_i32_14 = arith.constant 0 : i32
    %17 = tpu.memref_slice %arg3[%c2_i32, %c0_i32_13, %c0_i32_14] : memref<8x2x1024xf32, #tpu.memory_space<any>> -> memref<1x2x1024xf32, #tpu.memory_space<any>>
    %18 = tpu.memref_squeeze %17 : memref<1x2x1024xf32, #tpu.memory_space<any>> -> memref<2x1024xf32, #tpu.memory_space<any>>
    %19 = tpu.memref_slice %arg4[%c2_i32_10] : memref<8x!tpu.dma_semaphore, #tpu.memory_space<semaphore_mem>> -> memref<1x!tpu.dma_semaphore, #tpu.memory_space<semaphore_mem>>
    %20 = tpu.memref_squeeze %19 : memref<1x!tpu.dma_semaphore, #tpu.memory_space<semaphore_mem>> -> memref<!tpu.dma_semaphore, #tpu.memory_space<semaphore_mem>>
    tpu.enqueue_dma source(%16 : memref<2x1024xf32, #tpu.memory_space<any>>) target(%18 : memref<2x1024xf32, #tpu.memory_space<any>>) target_semaphore(%20 : memref<!tpu.dma_semaphore, #tpu.memory_space<semaphore_mem>>)
    %c3 = arith.constant 3 : index
    %21 = memref.load %arg1[%c3] : memref<8xi32, #tpu.memory_space<smem>>
    %c3_i32 = arith.constant 3 : i32
    %c3_i32_15 = arith.constant 3 : i32
    %c0_i32_16 = arith.constant 0 : i32
    %c0_i32_17 = arith.constant 0 : i32
    %22 = tpu.memref_slice %arg2[%21, %c0_i32_16, %c0_i32_17] : memref<16x2x1024xf32, #tpu.memory_space<any>> -> memref<1x2x1024xf32, #tpu.memory_space<any>>
    %23 = tpu.memref_squeeze %22 : memref<1x2x1024xf32, #tpu.memory_space<any>> -> memref<2x1024xf32, #tpu.memory_space<any>>
    %c0_i32_18 = arith.constant 0 : i32
    %c0_i32_19 = arith.constant 0 : i32
    %24 = tpu.memref_slice %arg3[%c3_i32, %c0_i32_18, %c0_i32_19] : memref<8x2x1024xf32, #tpu.memory_space<any>> -> memref<1x2x1024xf32, #tpu.memory_space<any>>
    %25 = tpu.memref_squeeze %24 : memref<1x2x1024xf32, #tpu.memory_space<any>> -> memref<2x1024xf32, #tpu.memory_space<any>>
    %26 = tpu.memref_slice %arg4[%c3_i32_15] : memref<8x!tpu.dma_semaphore, #tpu.memory_space<semaphore_mem>> -> memref<1x!tpu.dma_semaphore, #tpu.memory_space<semaphore_mem>>
    %27 = tpu.memref_squeeze %26 : memref<1x!tpu.dma_semaphore, #tpu.memory_space<semaphore_mem>> -> memref<!tpu.dma_semaphore, #tpu.memory_space<semaphore_mem>>
    tpu.enqueue_dma source(%23 : memref<2x1024xf32, #tpu.memory_space<any>>) target(%25 : memref<2x1024xf32, #tpu.memory_space<any>>) target_semaphore(%27 : memref<!tpu.dma_semaphore, #tpu.memory_space<semaphore_mem>>)
    %c4 = arith.constant 4 : index
    %28 = memref.load %arg1[%c4] : memref<8xi32, #tpu.memory_space<smem>>
    %c4_i32 = arith.constant 4 : i32
    %c4_i32_20 = arith.constant 4 : i32
    %c0_i32_21 = arith.constant 0 : i32
    %c0_i32_22 = arith.constant 0 : i32
    %29 = tpu.memref_slice %arg2[%28, %c0_i32_21, %c0_i32_22] : memref<16x2x1024xf32, #tpu.memory_space<any>> -> memref<1x2x1024xf32, #tpu.memory_space<any>>
    %30 = tpu.memref_squeeze %29 : memref<1x2x1024xf32, #tpu.memory_space<any>> -> memref<2x1024xf32, #tpu.memory_space<any>>
    %c0_i32_23 = arith.constant 0 : i32
    %c0_i32_24 = arith.constant 0 : i32
    %31 = tpu.memref_slice %arg3[%c4_i32, %c0_i32_23, %c0_i32_24] : memref<8x2x1024xf32, #tpu.memory_space<any>> -> memref<1x2x1024xf32, #tpu.memory_space<any>>
    %32 = tpu.memref_squeeze %31 : memref<1x2x1024xf32, #tpu.memory_space<any>> -> memref<2x1024xf32, #tpu.memory_space<any>>
    %33 = tpu.memref_slice %arg4[%c4_i32_20] : memref<8x!tpu.dma_semaphore, #tpu.memory_space<semaphore_mem>> -> memref<1x!tpu.dma_semaphore, #tpu.memory_space<semaphore_mem>>
    %34 = tpu.memref_squeeze %33 : memref<1x!tpu.dma_semaphore, #tpu.memory_space<semaphore_mem>> -> memref<!tpu.dma_semaphore, #tpu.memory_space<semaphore_mem>>
    tpu.enqueue_dma source(%30 : memref<2x1024xf32, #tpu.memory_space<any>>) target(%32 : memref<2x1024xf32, #tpu.memory_space<any>>) target_semaphore(%34 : memref<!tpu.dma_semaphore, #tpu.memory_space<semaphore_mem>>)
    %c5 = arith.constant 5 : index
    %35 = memref.load %arg1[%c5] : memref<8xi32, #tpu.memory_space<smem>>
    %c5_i32 = arith.constant 5 : i32
    %c5_i32_25 = arith.constant 5 : i32
    %c0_i32_26 = arith.constant 0 : i32
    %c0_i32_27 = arith.constant 0 : i32
    %36 = tpu.memref_slice %arg2[%35, %c0_i32_26, %c0_i32_27] : memref<16x2x1024xf32, #tpu.memory_space<any>> -> memref<1x2x1024xf32, #tpu.memory_space<any>>
    %37 = tpu.memref_squeeze %36 : memref<1x2x1024xf32, #tpu.memory_space<any>> -> memref<2x1024xf32, #tpu.memory_space<any>>
    %c0_i32_28 = arith.constant 0 : i32
    %c0_i32_29 = arith.constant 0 : i32
    %38 = tpu.memref_slice %arg3[%c5_i32, %c0_i32_28, %c0_i32_29] : memref<8x2x1024xf32, #tpu.memory_space<any>> -> memref<1x2x1024xf32, #tpu.memory_space<any>>
    %39 = tpu.memref_squeeze %38 : memref<1x2x1024xf32, #tpu.memory_space<any>> -> memref<2x1024xf32, #tpu.memory_space<any>>
    %40 = tpu.memref_slice %arg4[%c5_i32_25] : memref<8x!tpu.dma_semaphore, #tpu.memory_space<semaphore_mem>> -> memref<1x!tpu.dma_semaphore, #tpu.memory_space<semaphore_mem>>
    %41 = tpu.memref_squeeze %40 : memref<1x!tpu.dma_semaphore, #tpu.memory_space<semaphore_mem>> -> memref<!tpu.dma_semaphore, #tpu.memory_space<semaphore_mem>>
    tpu.enqueue_dma source(%37 : memref<2x1024xf32, #tpu.memory_space<any>>) target(%39 : memref<2x1024xf32, #tpu.memory_space<any>>) target_semaphore(%41 : memref<!tpu.dma_semaphore, #tpu.memory_space<semaphore_mem>>)
    %c6 = arith.constant 6 : index
    %42 = memref.load %arg1[%c6] : memref<8xi32, #tpu.memory_space<smem>>
    %c6_i32 = arith.constant 6 : i32
    %c6_i32_30 = arith.constant 6 : i32
    %c0_i32_31 = arith.constant 0 : i32
    %c0_i32_32 = arith.constant 0 : i32
    %43 = tpu.memref_slice %arg2[%42, %c0_i32_31, %c0_i32_32] : memref<16x2x1024xf32, #tpu.memory_space<any>> -> memref<1x2x1024xf32, #tpu.memory_space<any>>
    %44 = tpu.memref_squeeze %43 : memref<1x2x1024xf32, #tpu.memory_space<any>> -> memref<2x1024xf32, #tpu.memory_space<any>>
    %c0_i32_33 = arith.constant 0 : i32
    %c0_i32_34 = arith.constant 0 : i32
    %45 = tpu.memref_slice %arg3[%c6_i32, %c0_i32_33, %c0_i32_34] : memref<8x2x1024xf32, #tpu.memory_space<any>> -> memref<1x2x1024xf32, #tpu.memory_space<any>>
    %46 = tpu.memref_squeeze %45 : memref<1x2x1024xf32, #tpu.memory_space<any>> -> memref<2x1024xf32, #tpu.memory_space<any>>
    %47 = tpu.memref_slice %arg4[%c6_i32_30] : memref<8x!tpu.dma_semaphore, #tpu.memory_space<semaphore_mem>> -> memref<1x!tpu.dma_semaphore, #tpu.memory_space<semaphore_mem>>
    %48 = tpu.memref_squeeze %47 : memref<1x!tpu.dma_semaphore, #tpu.memory_space<semaphore_mem>> -> memref<!tpu.dma_semaphore, #tpu.memory_space<semaphore_mem>>
    tpu.enqueue_dma source(%44 : memref<2x1024xf32, #tpu.memory_space<any>>) target(%46 : memref<2x1024xf32, #tpu.memory_space<any>>) target_semaphore(%48 : memref<!tpu.dma_semaphore, #tpu.memory_space<semaphore_mem>>)
    %c7 = arith.constant 7 : index
    %49 = memref.load %arg1[%c7] : memref<8xi32, #tpu.memory_space<smem>>
    %c7_i32 = arith.constant 7 : i32
    %c7_i32_35 = arith.constant 7 : i32
    %c0_i32_36 = arith.constant 0 : i32
    %c0_i32_37 = arith.constant 0 : i32
    %50 = tpu.memref_slice %arg2[%49, %c0_i32_36, %c0_i32_37] : memref<16x2x1024xf32, #tpu.memory_space<any>> -> memref<1x2x1024xf32, #tpu.memory_space<any>>
    %51 = tpu.memref_squeeze %50 : memref<1x2x1024xf32, #tpu.memory_space<any>> -> memref<2x1024xf32, #tpu.memory_space<any>>
    %c0_i32_38 = arith.constant 0 : i32
    %c0_i32_39 = arith.constant 0 : i32
    %52 = tpu.memref_slice %arg3[%c7_i32, %c0_i32_38, %c0_i32_39] : memref<8x2x1024xf32, #tpu.memory_space<any>> -> memref<1x2x1024xf32, #tpu.memory_space<any>>
    %53 = tpu.memref_squeeze %52 : memref<1x2x1024xf32, #tpu.memory_space<any>> -> memref<2x1024xf32, #tpu.memory_space<any>>
    %54 = tpu.memref_slice %arg4[%c7_i32_35] : memref<8x!tpu.dma_semaphore, #tpu.memory_space<semaphore_mem>> -> memref<1x!tpu.dma_semaphore, #tpu.memory_space<semaphore_mem>>
    %55 = tpu.memref_squeeze %54 : memref<1x!tpu.dma_semaphore, #tpu.memory_space<semaphore_mem>> -> memref<!tpu.dma_semaphore, #tpu.memory_space<semaphore_mem>>
    tpu.enqueue_dma source(%51 : memref<2x1024xf32, #tpu.memory_space<any>>) target(%53 : memref<2x1024xf32, #tpu.memory_space<any>>) target_semaphore(%55 : memref<!tpu.dma_semaphore, #tpu.memory_space<semaphore_mem>>)
    %c0_i32_40 = arith.constant 0 : i32
    %c8_i32 = arith.constant 8 : i32
    %56 = arith.addi %c0_i32_40, %c8_i32 : i32
    %c1_i32_41 = arith.constant 1 : i32
    scf.for %arg5 = %c0_i32_40 to %56 step %c1_i32_41  : i32 {
      %c1_i32_43 = arith.constant 1 : i32
      %57 = arith.muli %arg5, %c1_i32_43 : i32
      %c0_i32_44 = arith.constant 0 : i32
      %58 = arith.addi %c0_i32_44, %57 : i32
      %c7_i32_45 = arith.constant 7 : i32
      %59 = arith.andi %58, %c7_i32_45 : i32
      %c0_i32_46 = arith.constant 0 : i32
      %c0_i32_47 = arith.constant 0 : i32
      %c0_i32_48 = arith.constant 0 : i32
      %c0_i32_49 = arith.constant 0 : i32
      %60 = tpu.memref_slice %arg2[%c0_i32_46, %c0_i32_48, %c0_i32_49] : memref<16x2x1024xf32, #tpu.memory_space<any>> -> memref<1x2x1024xf32, #tpu.memory_space<any>>
      %61 = tpu.memref_squeeze %60 : memref<1x2x1024xf32, #tpu.memory_space<any>> -> memref<2x1024xf32, #tpu.memory_space<any>>
      %c0_i32_50 = arith.constant 0 : i32
      %c0_i32_51 = arith.constant 0 : i32
      %62 = tpu.memref_slice %arg3[%c0_i32_47, %c0_i32_50, %c0_i32_51] : memref<8x2x1024xf32, #tpu.memory_space<any>> -> memref<1x2x1024xf32, #tpu.memory_space<any>>
      %63 = tpu.memref_squeeze %62 : memref<1x2x1024xf32, #tpu.memory_space<any>> -> memref<2x1024xf32, #tpu.memory_space<any>>
      %64 = tpu.memref_slice %arg4[%59] : memref<8x!tpu.dma_semaphore, #tpu.memory_space<semaphore_mem>> -> memref<1x!tpu.dma_semaphore, #tpu.memory_space<semaphore_mem>>
      %65 = tpu.memref_squeeze %64 : memref<1x!tpu.dma_semaphore, #tpu.memory_space<semaphore_mem>> -> memref<!tpu.dma_semaphore, #tpu.memory_space<semaphore_mem>>
      tpu.wait_dma2 semaphore(%65 : memref<!tpu.dma_semaphore, #tpu.memory_space<semaphore_mem>>) src(%61 : memref<2x1024xf32, #tpu.memory_space<any>>) dst(%63 : memref<2x1024xf32, #tpu.memory_space<any>>)
      %c8_i32_52 = arith.constant 8 : i32
      %66 = arith.addi %58, %c8_i32_52 : i32
      %c8_i32_53 = arith.constant 8 : i32
      %67 = arith.cmpi slt, %66, %c8_i32_53 : i32
      %68 = arith.extui %67 : i1 to i32
      %c0_i32_54 = arith.constant 0 : i32
      %69 = arith.cmpi ne, %68, %c0_i32_54 : i32
      scf.if %69 {
        %70 = arith.index_cast %66 : i32 to index
        %71 = memref.load %arg1[%70] : memref<8xi32, #tpu.memory_space<smem>>
        %c0_i32_55 = arith.constant 0 : i32
        %c0_i32_56 = arith.constant 0 : i32
        %72 = tpu.memref_slice %arg2[%71, %c0_i32_55, %c0_i32_56] : memref<16x2x1024xf32, #tpu.memory_space<any>> -> memref<1x2x1024xf32, #tpu.memory_space<any>>
        %73 = tpu.memref_squeeze %72 : memref<1x2x1024xf32, #tpu.memory_space<any>> -> memref<2x1024xf32, #tpu.memory_space<any>>
        %c0_i32_57 = arith.constant 0 : i32
        %c0_i32_58 = arith.constant 0 : i32
        %74 = tpu.memref_slice %arg3[%66, %c0_i32_57, %c0_i32_58] : memref<8x2x1024xf32, #tpu.memory_space<any>> -> memref<1x2x1024xf32, #tpu.memory_space<any>>
        %75 = tpu.memref_squeeze %74 : memref<1x2x1024xf32, #tpu.memory_space<any>> -> memref<2x1024xf32, #tpu.memory_space<any>>
        %76 = tpu.memref_slice %arg4[%59] : memref<8x!tpu.dma_semaphore, #tpu.memory_space<semaphore_mem>> -> memref<1x!tpu.dma_semaphore, #tpu.memory_space<semaphore_mem>>
        %77 = tpu.memref_squeeze %76 : memref<1x!tpu.dma_semaphore, #tpu.memory_space<semaphore_mem>> -> memref<!tpu.dma_semaphore, #tpu.memory_space<semaphore_mem>>
        tpu.enqueue_dma source(%73 : memref<2x1024xf32, #tpu.memory_space<any>>) target(%75 : memref<2x1024xf32, #tpu.memory_space<any>>) target_semaphore(%77 : memref<!tpu.dma_semaphore, #tpu.memory_space<semaphore_mem>>)
      } else {
      }
    }
    %c8_i32_42 = arith.constant 8 : i32
    return
  }
}

</mosaic_0001>

<llo_original>
// kernel: tpu_custom_call.1
$region0: #{tpu_custom_call.1}
  #allocation0 [shape = 'u32[]', space=smem, size = 0x4, offset = 0x4, fixed_abs, tag = 'smem constant byte address 0x4 - core index']
  #allocation1 [shape = 'u32[72,128]{1,0:T(1,128)}', space=vmem, size = 0x9000, scoped, tag = 'internal scratch']
  #allocation2 [shape = 's32[8]{0}', space=sflag, size = 0x20, scoped, tag = 'scratch operand']
  #allocation3 [shape = 's32[1]{0}', space=sflag, size = 0x4, scoped, tag = 'scoped memory for tpu_custom_call.1']
  #allocation4 [shape = 'u8[512]{0}', space=smem, size = 0x200, scoped, tag = 'prefetched SMEM operand 0']
  #allocation5 [shape = 's32[]', space=sflag, size = 0x4, offset = 0, fixed_abs, tag = 'sflag constant byte address 0x0 - dummy sync flag']
  #allocation6 [shape = 'u32[0]{0}', space=smem, size = 0, offset = 0, fixed_abs, tag = 'smem constant byte address 0x0 - null']
  #allocation7 [shape = 's32[]', space=sflag, size = 0x4, offset = 0, fixed_abs, tag = 'sflag constant byte address 0x0 - dummy sync flag']
  #allocation8 [shape = 'u32[0]{0}', space=smem, size = 0, offset = 0, fixed_abs, tag = 'smem constant byte address 0x0 - null']
  #allocation9 [shape = 's32[]', space=sflag, size = 0x4, offset = 0, fixed_abs, tag = 'sflag constant byte address 0x0 - dummy sync flag']
  #allocation10 [shape = 'u32[0]{0}', space=smem, size = 0, offset = 0, fixed_abs, tag = 'smem constant byte address 0x0 - null']
  #allocation11 [shape = 's32[]', space=sflag, size = 0x4, offset = 0, fixed_abs, tag = 'sflag constant byte address 0x0 - dummy sync flag']
  #allocation12 [shape = 'u32[0]{0}', space=smem, size = 0, offset = 0, fixed_abs, tag = 'smem constant byte address 0x0 - null']
  #allocation13 [shape = 's32[]', space=sflag, size = 0x4, offset = 0, fixed_abs, tag = 'sflag constant byte address 0x0 - dummy sync flag']
  #allocation14 [shape = 'u32[0]{0}', space=smem, size = 0, offset = 0, fixed_abs, tag = 'smem constant byte address 0x0 - null']
  #allocation15 [shape = 's32[]', space=sflag, size = 0x4, offset = 0, fixed_abs, tag = 'sflag constant byte address 0x0 - dummy sync flag']
  #allocation16 [shape = 'u32[0]{0}', space=smem, size = 0, offset = 0, fixed_abs, tag = 'smem constant byte address 0x0 - null']
  #allocation17 [shape = 's32[]', space=sflag, size = 0x4, offset = 0, fixed_abs, tag = 'sflag constant byte address 0x0 - dummy sync flag']
  #allocation18 [shape = 'u32[0]{0}', space=smem, size = 0, offset = 0, fixed_abs, tag = 'smem constant byte address 0x0 - null']
  #allocation19 [shape = 's32[]', space=sflag, size = 0x4, offset = 0, fixed_abs, tag = 'sflag constant byte address 0x0 - dummy sync flag']
  #allocation20 [shape = 'u32[0]{0}', space=smem, size = 0, offset = 0, fixed_abs, tag = 'smem constant byte address 0x0 - null']
  #allocation21 [shape = 's32[]', space=sflag, size = 0x4, offset = 0, fixed_abs, tag = 'sflag constant byte address 0x0 - dummy sync flag']
  #allocation22 [shape = 'u32[0]{0}', space=smem, size = 0, offset = 0, fixed_abs, tag = 'smem constant byte address 0x0 - null']
  %s0 = inlined_call_operand.hbm [shape: s32[8], index: 0, kind: input, shape index: {}]
  %s1 = inlined_call_operand.hbm [shape: f32[16,2,1024], index: 1, kind: input, shape index: {}]
  %s2 = inlined_call_operand.hbm [shape: f32[8,2,1024], index: 2, kind: output, shape index: {}]
  %s3 = sld [smem:[#allocation0]]
  $region13: #{tpu_custom_call.1} parent=0
    _
  %s5 = ssub.s32 1, %s3
  %s6 = scalar_select 0, %s5, %s3
  %s8 = sshll.u32 %s0, 4
  %s9 = int_to_ptr.hbm [resolvable:$true] %s8
  %11 = dma.hbm_to_smem %s9, 16, [#allocation4], [#allocation3]
  %13 = dma.done [#allocation3], 16
  %14 = sfence
  %s15 = sld [smem:[#allocation4]]
  %s16 = smul.u32 %s15, 8
  %s17 = smul.addr %s16, 2
  %s18 = scalar_lea.hbm %s1, %s17
  %s20 = sshll.u32 1, 14
  %s21 = sxor.u32 4294967295, %s20
  %s23 = sshll.u32 %s18, 4
  %s24 = int_to_ptr.hbm [resolvable:$true] %s23
  %s25 = sshll.u32 %s2, 4
  %s26 = int_to_ptr.hbm [resolvable:$true] %s25
  %29 = dma.general %s24, 256, %s26, [#allocation2], [#allocation5], [#allocation6], 0, 0
  %s30 = sld [smem:[#allocation4 + $0x1]]
  %s31 = smul.u32 %s30, 8
  %s32 = smul.addr %s31, 2
  %s33 = scalar_lea.hbm %s1, %s32
  %s34 = scalar_lea.hbm %s2, 16
  %s35 = scalar_lea.sflag [#allocation2], 1
  %s37 = sshll.u32 1, 14
  %s38 = sxor.u32 4294967295, %s37
  %s40 = sshll.u32 %s33, 4
  %s41 = int_to_ptr.hbm [resolvable:$true] %s40
  %s42 = sshll.u32 %s34, 4
  %s43 = int_to_ptr.hbm [resolvable:$true] %s42
  %46 = dma.general %s41, 256, %s43, %s35, [#allocation7], [#allocation8], 0, 0
  %s47 = sld [smem:[#allocation4 + $0x2]]
  %s48 = smul.u32 %s47, 8
  %s49 = smul.addr %s48, 2
  %s50 = scalar_lea.hbm %s1, %s49
  %s51 = scalar_lea.hbm %s2, 32
  %s52 = scalar_lea.sflag [#allocation2], 2
  %s54 = sshll.u32 1, 14
  %s55 = sxor.u32 4294967295, %s54
  %s57 = sshll.u32 %s50, 4
  %s58 = int_to_ptr.hbm [resolvable:$true] %s57
  %s59 = sshll.u32 %s51, 4
  %s60 = int_to_ptr.hbm [resolvable:$true] %s59
  %63 = dma.general %s58, 256, %s60, %s52, [#allocation9], [#allocation10], 0, 0
  %s64 = sld [smem:[#allocation4 + $0x3]]
  %s65 = smul.u32 %s64, 8
  %s66 = smul.addr %s65, 2
  %s67 = scalar_lea.hbm %s1, %s66
  %s68 = scalar_lea.hbm %s2, 48
  %s69 = scalar_lea.sflag [#allocation2], 3
  %s71 = sshll.u32 1, 14
  %s72 = sxor.u32 4294967295, %s71
  %s74 = sshll.u32 %s67, 4
  %s75 = int_to_ptr.hbm [resolvable:$true] %s74
  %s76 = sshll.u32 %s68, 4
  %s77 = int_to_ptr.hbm [resolvable:$true] %s76
  %80 = dma.general %s75, 256, %s77, %s69, [#allocation11], [#allocation12], 0, 0
  %s81 = sld [smem:[#allocation4 + $0x4]]
  %s82 = smul.u32 %s81, 8
  %s83 = smul.addr %s82, 2
  %s84 = scalar_lea.hbm %s1, %s83
  %s85 = scalar_lea.hbm %s2, 64
  %s86 = scalar_lea.sflag [#allocation2], 4
  %s88 = sshll.u32 1, 14
  %s89 = sxor.u32 4294967295, %s88
  %s91 = sshll.u32 %s84, 4
  %s92 = int_to_ptr.hbm [resolvable:$true] %s91
  %s93 = sshll.u32 %s85, 4
  %s94 = int_to_ptr.hbm [resolvable:$true] %s93
  %97 = dma.general %s92, 256, %s94, %s86, [#allocation13], [#allocation14], 0, 0
  %s98 = sld [smem:[#allocation4 + $0x5]]
  %s99 = smul.u32 %s98, 8
  %s100 = smul.addr %s99, 2
  %s101 = scalar_lea.hbm %s1, %s100
  %s102 = scalar_lea.hbm %s2, 80
  %s103 = scalar_lea.sflag [#allocation2], 5
  %s105 = sshll.u32 1, 14
  %s106 = sxor.u32 4294967295, %s105
  %s108 = sshll.u32 %s101, 4
  %s109 = int_to_ptr.hbm [resolvable:$true] %s108
  %s110 = sshll.u32 %s102, 4
  %s111 = int_to_ptr.hbm [resolvable:$true] %s110
  %114 = dma.general %s109, 256, %s111, %s103, [#allocation15], [#allocation16], 0, 0
  %s115 = sld [smem:[#allocation4 + $0x6]]
  %s116 = smul.u32 %s115, 8
  %s117 = smul.addr %s116, 2
  %s118 = scalar_lea.hbm %s1, %s117
  %s119 = scalar_lea.hbm %s2, 96
  %s120 = scalar_lea.sflag [#allocation2], 6
  %s122 = sshll.u32 1, 14
  %s123 = sxor.u32 4294967295, %s122
  %s125 = sshll.u32 %s118, 4
  %s126 = int_to_ptr.hbm [resolvable:$true] %s125
  %s127 = sshll.u32 %s119, 4
  %s128 = int_to_ptr.hbm [resolvable:$true] %s127
  %131 = dma.general %s126, 256, %s128, %s120, [#allocation17], [#allocation18], 0, 0
  %s132 = sld [smem:[#allocation4 + $0x7]]
  %s133 = smul.u32 %s132, 8
  %s134 = smul.addr %s133, 2
  %s135 = scalar_lea.hbm %s1, %s134
  %s136 = scalar_lea.hbm %s2, 112
  %s137 = scalar_lea.sflag [#allocation2], 7
  %s139 = sshll.u32 1, 14
  %s140 = sxor.u32 4294967295, %s139
  %s142 = sshll.u32 %s135, 4
  %s143 = int_to_ptr.hbm [resolvable:$true] %s142
  %s144 = sshll.u32 %s136, 4
  %s145 = int_to_ptr.hbm [resolvable:$true] %s144
  %148 = dma.general %s143, 256, %s145, %s137, [#allocation19], [#allocation20], 0, 0
  loop: start=0, step=1, limit=8
  $region2: #{tpu_custom_call.1} parent=0 // loop_pre_header
    _
  $region3: #{tpu_custom_call.1} parent=0 // loop_header
    %s150 = sphi 0, %s154
    %p151 = scmp.ge.s32.totalorder %s150, 8
  $region4: #{tpu_custom_call.1} parent=0 // loop_header_branch
    %153 = sbr.rel (%p151) target = $region8
  $region5: #{tpu_custom_call.1} parent=0 // loop_body
    %s155 = sand.u32 %s150, 7
    %s156 = scalar_lea.sflag [#allocation2], %s155
    %s157 = smul.u32 2, 1
    %s158 = smul.u32 %s157, 8
    %s159 = sshll.u32 %s158, 4
    %160 = dma.done %s156, %s159
    %s161 = sadd.s32 %s150, 8
    %p162 = scmp.lt.s32.totalorder %s161, 8
    // Predicated region
    $region9: #{tpu_custom_call.1} parent=5 // pred_check
      %p163 = pneg %p162
    $region10: #{tpu_custom_call.1} parent=5 // pred_check_branch
      %165 = sbr.rel (%p163) target = $region12
    $region11: #{tpu_custom_call.1} parent=5 // pred_region
      %s166 = sld [smem:[#allocation4 + %s161]]
      %s167 = smul.u32 %s166, 8
      %s168 = smul.addr %s167, 2
      %s169 = scalar_lea.hbm %s1, %s168
      %s170 = smul.u32 %s161, 8
      %s171 = smul.addr %s170, 2
      %s172 = scalar_lea.hbm %s2, %s171
      %s174 = sshll.u32 1, 14
      %s175 = sxor.u32 4294967295, %s174
      %s177 = sshll.u32 %s169, 4
      %s178 = int_to_ptr.hbm [resolvable:$true] %s177
      %s179 = sshll.u32 %s172, 4
      %s180 = int_to_ptr.hbm [resolvable:$true] %s179
      %183 = dma.general %s178, 256, %s180, %s156, [#allocation21], [#allocation22], 0, 0
    $region12: #{tpu_custom_call.1} parent=5 // pred_fallthru
      _
  $region6: #{tpu_custom_call.1} parent=0 // loop_footer
    %s154 = sadd.s32 1, %s150
  $region7: #{tpu_custom_call.1} parent=0 // loop_footer_branch
    %149 = sbr.rel target = $region3
  $region8: #{tpu_custom_call.1} parent=0 // loop_exit
    _
  %184 = vsyncmov [#allocation2]
  %s185 = vpop.sfrf %184
  %p186 = scmp.eq.s32.totalorder %s185, 0
  %p187 = pneg %p186
  %189 = shalt.err (%p187)
  %s190 = scalar_lea.sflag [#allocation2], 1
  %191 = vsyncmov %s190
  %s192 = vpop.sfrf %191
  %p193 = scmp.eq.s32.totalorder %s192, 0
  %p194 = pneg %p193
  %196 = shalt.err (%p194)
  %s197 = scalar_lea.sflag [#allocation2], 2
  %198 = vsyncmov %s197
  %s199 = vpop.sfrf %198
  %p200 = scmp.eq.s32.totalorder %s199, 0
  %p201 = pneg %p200
  %203 = shalt.err (%p201)
  %s204 = scalar_lea.sflag [#allocation2], 3
  %205 = vsyncmov %s204
  %s206 = vpop.sfrf %205
  %p207 = scmp.eq.s32.totalorder %s206, 0
  %p208 = pneg %p207
  %210 = shalt.err (%p208)
  %s211 = scalar_lea.sflag [#allocation2], 4
  %212 = vsyncmov %s211
  %s213 = vpop.sfrf %212
  %p214 = scmp.eq.s32.totalorder %s213, 0
  %p215 = pneg %p214
  %217 = shalt.err (%p215)
  %s218 = scalar_lea.sflag [#allocation2], 5
  %219 = vsyncmov %s218
  %s220 = vpop.sfrf %219
  %p221 = scmp.eq.s32.totalorder %s220, 0
  %p222 = pneg %p221
  %224 = shalt.err (%p222)
  %s225 = scalar_lea.sflag [#allocation2], 6
  %226 = vsyncmov %s225
  %s227 = vpop.sfrf %226
  %p228 = scmp.eq.s32.totalorder %s227, 0
  %p229 = pneg %p228
  %231 = shalt.err (%p229)
  %s232 = scalar_lea.sflag [#allocation2], 7
  %233 = vsyncmov %s232
  %s234 = vpop.sfrf %233
  %p235 = scmp.eq.s32.totalorder %s234, 0
  %p236 = pneg %p235
  %238 = shalt.err (%p236)

</llo_original>
